<compile_context>
chip_gen: v5e
topology: v5e:2x2
jax: 0.10.0
libtpu: 0.0.40
codegen_flags: <defaults>
</compile_context>

<pallas_src>
import functools

import jax
import jax.numpy as jnp
from jax.experimental import pallas as pl
from jax.experimental.pallas import tpu as pltpu

EPS = 1e-5


def _instance_norm_kernel(x_ref, g_ref, b_ref, o_ref, *, rows_tile, hw_true,
                          params_resident):
    """One grid step: normalize `rows_tile` (sample, channel) rows.

    x_ref : (rows_tile, HW_pad) tile; padded lane columns are zero.
    g_ref / b_ref : (NC, 1) VMEM-resident (constant index_map) when
                    params_resident, else per-step (rows_tile, 1) blocks.
    """
    x = x_ref[...].astype(jnp.float32)

    # Single-pass mean / biased variance over the true (unpadded) HW columns.
    # Zero padding contributes nothing to the sums; divide by the true count.
    inv_n = jnp.float32(1.0 / hw_true)
    s1 = jnp.sum(x, axis=-1, keepdims=True)
    s2 = jnp.sum(x * x, axis=-1, keepdims=True)
    mean = s1 * inv_n
    var = jnp.maximum(s2 * inv_n - mean * mean, 0.0)  # guard tiny cancellation
    inv = jax.lax.rsqrt(var + EPS)

    if params_resident:
        row0 = pl.multiple_of(pl.program_id(0) * rows_tile, rows_tile)
        g = g_ref[pl.ds(row0, rows_tile), :]
        b = b_ref[pl.ds(row0, rows_tile), :]
    else:
        g = g_ref[...]
        b = b_ref[...]

    # Fold normalization + affine into one per-row scale/shift.
    scale = inv * g
    shift = b - mean * scale
    o_ref[...] = (x * scale + shift).astype(o_ref.dtype)


def _pick_rows_tile(NC, HW_pad, itemsize, target_block_bytes):
    """Largest row tile that divides NC, respects sublane packing, keeps the
    x block near target_block_bytes, and leaves >=2 grid steps if possible."""
    itemsize = max(int(itemsize), 1)
    max_rows = max(1, target_block_bytes // (HW_pad * itemsize))
    pack = max(8, 32 // itemsize)  # 8 for f32, 16 for bf16, 32 for int8/fp8
    for step in (pack, 8):
        cands = [r for r in range(step, NC + 1, step) if NC % r == 0]
        if not cands:
            continue
        fitting = [r for r in cands if r <= max_rows]
        if not fitting:
            return min(cands)  # huge HW: smallest legal tile
        two_step = [r for r in fitting if NC // r >= 2]
        return max(two_step) if two_step else max(fitting)
    return NC  # NC smaller than a sublane pack: single full-extent block


def instance_norm_2d(x, weight, bias, *, target_block_bytes=2 << 20):
    """InstanceNorm2d forward. x: (N, C, H, W) NCHW; weight/bias: (C,)."""
    N, C, H, W = x.shape
    NC, HW = N * C, H * W

    # Lane-dense last dim: pad HW up to a multiple of 128. Padded columns are
    # zero and are excluded from the statistics by dividing by the true HW.
    HW_pad = -(-HW // 128) * 128

    x2d = x.reshape(NC, HW)
    if HW_pad != HW:
        x2d = jnp.pad(x2d, ((0, 0), (0, HW_pad - HW)))

    rows_tile = _pick_rows_tile(NC, HW_pad, x.dtype.itemsize, target_block_bytes)
    grid = (NC // rows_tile,)

    # Per-row affine params (row = n*C + c -> channel c = row % C).
    g_rows = jnp.tile(weight.astype(jnp.float32), N).reshape(NC, 1)
    b_rows = jnp.tile(bias.astype(jnp.float32), N).reshape(NC, 1)

    # Keep params VMEM-resident (one DMA for the whole grid) unless NC is so
    # large that the lane-padded (NC, 1) footprint would waste VMEM.
    per_param_vmem = ((NC + 7) // 8) * 8 * 128 * 4
    params_resident = 2 * per_param_vmem <= (4 << 20)
    if params_resident:
        param_spec = pl.BlockSpec((NC, 1), lambda i: (0, 0))      # resident
    else:
        param_spec = pl.BlockSpec((rows_tile, 1), lambda i: (i, 0))

    kernel = functools.partial(
        _instance_norm_kernel,
        rows_tile=rows_tile,
        hw_true=HW,
        params_resident=params_resident,
    )

    out2d = pl.pallas_call(
        kernel,
        out_shape=jax.ShapeDtypeStruct((NC, HW_pad), x.dtype),
        grid_spec=pltpu.PrefetchScalarGridSpec(
            num_scalar_prefetch=0,
            grid=grid,
            in_specs=[
                pl.BlockSpec((rows_tile, HW_pad), lambda i: (i, 0)),
                param_spec,
                param_spec,
            ],
            out_specs=pl.BlockSpec((rows_tile, HW_pad), lambda i: (i, 0)),
        ),
        compiler_params=pltpu.CompilerParams(
            dimension_semantics=("parallel",),
            # Above the 16 MiB (v5e) / 32 MiB (v6e, v7x) scoped defaults,
            # below v7x's 64 MiB physical VMEM.
            vmem_limit_bytes=48 * 1024 * 1024,
        ),
    )(x2d, g_rows, b_rows)

    if HW_pad != HW:
        out2d = out2d[:, :HW]
    return out2d.reshape(N, C, H, W)


def _reference_instance_norm(x, weight, bias):
    xf = x.astype(jnp.float32)
    mean = xf.mean(axis=(2, 3), keepdims=True)
    var = xf.var(axis=(2, 3), keepdims=True)  # biased, as in PyTorch
    y = (xf - mean) / jnp.sqrt(var + EPS)
    y = y * weight[None, :, None, None] + bias[None, :, None, None]
    return y.astype(x.dtype)


if __name__ == "__main__":
    key = jax.random.PRNGKey(0)
    kx, kw, kb = jax.random.split(key, 3)

    N, C, H, W = 2, 4, 16, 16
    x = jax.random.normal(kx, (N, C, H, W), dtype=jnp.float32)
    # PyTorch default init is weight=1, bias=0; random values exercise the
    # affine path deterministically.
    weight = 1.0 + 0.1 * jax.random.normal(kw, (C,), dtype=jnp.float32)
    bias = 0.1 * jax.random.normal(kb, (C,), dtype=jnp.float32)

    out = instance_norm_2d(x, weight, bias)
    out = jax.block_until_ready(out)

    ref = _reference_instance_norm(x, weight, bias)
    assert out.shape == (N, C, H, W)
    assert jnp.allclose(out, ref, atol=2e-5, rtol=1e-5), "mismatch vs reference"

    print("KERNEL_OK")
</pallas_src>

<mosaic_0001>
module attributes {stable_mosaic.version = 11 : i64} {
  func.func @_instance_norm_kernel(%arg0: i32, %arg1: memref<8x256xf32, #tpu.memory_space<vmem>>, %arg2: memref<8x1xf32, #tpu.memory_space<vmem>>, %arg3: memref<8x1xf32, #tpu.memory_space<vmem>>, %arg4: memref<8x256xf32, #tpu.memory_space<vmem>>) attributes {dimension_semantics = [#tpu.dimension_semantics<parallel>], iteration_bounds = array<i64: 1>, scalar_prefetch = 0 : i64, scratch_operands = 0 : i64, tpu.core_type = #tpu.core_type<tc>, window_params = [{transform_indices = @transform_0, window_bounds = array<i64: 8, 256>}, {pipeline_mode = #tpu.pipeline_mode<synchronous>, transform_indices = @transform_1, window_bounds = array<i64: 8, 1>}, {pipeline_mode = #tpu.pipeline_mode<synchronous>, transform_indices = @transform_2, window_bounds = array<i64: 8, 1>}, {transform_indices = @transform_3, window_bounds = array<i64: 8, 256>}]} {
    %c0 = arith.constant 0 : index
    %c0_0 = arith.constant 0 : index
    %0 = vector.load %arg1[%c0, %c0_0] : memref<8x256xf32, #tpu.memory_space<vmem>>, vector<8x256xf32>
    %cst = arith.constant dense<0.000000e+00> : vector<8xf32>
    %1 = vector.multi_reduction <add>, %0, %cst [1] : vector<8x256xf32> to vector<8xf32>
    %2 = vector.shape_cast %1 : vector<8xf32> to vector<8x1xf32>
    %3 = arith.mulf %0, %0 : vector<8x256xf32>
    %cst_1 = arith.constant dense<0.000000e+00> : vector<8xf32>
    %4 = vector.multi_reduction <add>, %3, %cst_1 [1] : vector<8x256xf32> to vector<8xf32>
    %5 = vector.shape_cast %4 : vector<8xf32> to vector<8x1xf32>
    %cst_2 = arith.constant 3.906250e-03 : f32
    %6 = vector.broadcast %cst_2 : f32 to vector<8x1xf32>
    %7 = arith.mulf %2, %6 : vector<8x1xf32>
    %cst_3 = arith.constant 3.906250e-03 : f32
    %8 = vector.broadcast %cst_3 : f32 to vector<8x1xf32>
    %9 = arith.mulf %5, %8 : vector<8x1xf32>
    %10 = arith.mulf %7, %7 : vector<8x1xf32>
    %11 = arith.subf %9, %10 : vector<8x1xf32>
    %cst_4 = arith.constant 0.000000e+00 : f32
    %12 = vector.broadcast %cst_4 : f32 to vector<8x1xf32>
    %13 = arith.maximumf %11, %12 : vector<8x1xf32>
    %cst_5 = arith.constant 9.99999974E-6 : f32
    %14 = vector.broadcast %cst_5 : f32 to vector<8x1xf32>
    %15 = arith.addf %13, %14 : vector<8x1xf32>
    %16 = math.rsqrt %15 : vector<8x1xf32>
    %c8_i32 = arith.constant 8 : i32
    %17 = arith.muli %arg0, %c8_i32 : i32
    %18 = tpu.assume_multiple %17, 8 : i32
    %19 = arith.index_cast %18 : i32 to index
    %c0_6 = arith.constant 0 : index
    %20 = vector.load %arg2[%19, %c0_6] : memref<8x1xf32, #tpu.memory_space<vmem>>, vector<8x1xf32>
    %21 = arith.index_cast %18 : i32 to index
    %c0_7 = arith.constant 0 : index
    %22 = vector.load %arg3[%21, %c0_7] : memref<8x1xf32, #tpu.memory_space<vmem>>, vector<8x1xf32>
    %23 = arith.mulf %16, %20 : vector<8x1xf32>
    %24 = arith.mulf %7, %23 : vector<8x1xf32>
    %25 = arith.subf %22, %24 : vector<8x1xf32>
    %26 = vector.broadcast %23 : vector<8x1xf32> to vector<8x256xf32>
    %27 = arith.mulf %0, %26 : vector<8x256xf32>
    %28 = vector.broadcast %25 : vector<8x1xf32> to vector<8x256xf32>
    %29 = arith.addf %27, %28 : vector<8x256xf32>
    %c0_8 = arith.constant 0 : index
    %c0_9 = arith.constant 0 : index
    %30 = vector.load %arg4[%c0_8, %c0_9] : memref<8x256xf32, #tpu.memory_space<vmem>>, vector<8x256xf32>
    tpu.vector_store %arg4[%c0_8, %c0_9], %29 {strides = array<i32>} : memref<8x256xf32, #tpu.memory_space<vmem>>, vector<8x256xf32>,
    return
  }
  func.func @transform_0(%arg0: i32) -> (i32, i32) {
    %c0_i32 = arith.constant 0 : i32
    %c0_i32_0 = arith.constant 0 : i32
    return %arg0, %c0_i32 : i32, i32
  }
  func.func @transform_1(%arg0: i32) -> (i32, i32) {
    %c0_i32 = arith.constant 0 : i32
    %c0_i32_0 = arith.constant 0 : i32
    %c0_i32_1 = arith.constant 0 : i32
    return %c0_i32, %c0_i32_0 : i32, i32
  }
  func.func @transform_2(%arg0: i32) -> (i32, i32) {
    %c0_i32 = arith.constant 0 : i32
    %c0_i32_0 = arith.constant 0 : i32
    %c0_i32_1 = arith.constant 0 : i32
    return %c0_i32, %c0_i32_0 : i32, i32
  }
  func.func @transform_3(%arg0: i32) -> (i32, i32) {
    %c0_i32 = arith.constant 0 : i32
    %c0_i32_0 = arith.constant 0 : i32
    return %arg0, %c0_i32 : i32, i32
  }
}

</mosaic_0001>

<llo_original>
// kernel: tpu_custom_call.1
$region0: #{tpu_custom_call.1}
  #allocation0 [shape = 'u32[]', space=smem, size = 0x4, offset = 0x4, fixed_abs, tag = 'smem constant byte address 0x4 - core index']
  #allocation1 [shape = 'u32[72,128]{1,0:T(1,128)}', space=vmem, size = 0x9000, scoped, tag = 'internal scratch']
  %s0 = inlined_call_operand.vmem [shape: f32[8,256], index: 0, kind: input, shape index: {}]
  %s1 = inlined_call_operand.vmem [shape: f32[8,1], index: 1, kind: input, shape index: {}]
  %s2 = inlined_call_operand.vmem [shape: f32[8,1], index: 2, kind: input, shape index: {}]
  %s3 = inlined_call_operand.hbm [shape: f32[8,256], index: 3, kind: output, shape index: {}]
  %s4 = sld [smem:[#allocation0]]
  $region22: #{tpu_custom_call.1} parent=0
    _
  %s6 = ssub.s32 1, %s4
  %s7 = scalar_select 0, %s6, %s4
  $region1: #{tpu_custom_call.1} parent=0
    #allocation2 [shape = 'u8[8192]{0}', space=vmem, size = 0x2000, scoped, tag = 'output window, operand 0, single buffered']
    #allocation3 [shape = 's32[1]{0}', space=sflag, size = 0x4, scoped, tag = 'scoped memory for tpu_custom_call.1']
    %8 = vsyncpa [#allocation3], 0
    // Predicated region
    $region2: #{tpu_custom_call.1} parent=1 // pred_check
      _
    $region3: #{tpu_custom_call.1} parent=1 // pred_check_branch
      %10 = sbr.rel (0) target = $region5
    $region4: #{tpu_custom_call.1} parent=1 // pred_region
      _
    $region5: #{tpu_custom_call.1} parent=1 // pred_fallthru
      _
    // Predicated region
    $region6: #{tpu_custom_call.1} parent=1 // pred_check
      _
    $region7: #{tpu_custom_call.1} parent=1 // pred_check_branch
      %12 = sbr.rel (0) target = $region9
    $region8: #{tpu_custom_call.1} parent=1 // pred_region
      _
    $region9: #{tpu_custom_call.1} parent=1 // pred_fallthru
      _
    // Predicated region
    $region10: #{tpu_custom_call.1} parent=1 // pred_check
      _
    $region11: #{tpu_custom_call.1} parent=1 // pred_check_branch
      %14 = sbr.rel (0) target = $region13
    $region12: #{tpu_custom_call.1} parent=1 // pred_region
      _
    $region13: #{tpu_custom_call.1} parent=1 // pred_fallthru
      _
    %v15 = vld [vmem:[%s0] sm:$0xff]
    %v16 = vld [vmem:[%s0 + $0x8] sm:$0xff]
    %v17 = vadd.f32 %v15, %v16
    %18 = vadd.xlane.f32.xlu0 %v17
    %v19 = vpop.xlane.xlu0 %18
    %v20 = vmul.f32 %v15, %v15
    %v21 = vmul.f32 %v16, %v16
    %v22 = vadd.f32 %v20, %v21
    %23 = vadd.xlane.f32.xlu0 %v22
    %v24 = vpop.xlane.xlu0 %23
    %v25 = vmul.f32 %v19, 0.00390625
    %v26 = vmul.f32 %v24, 0.00390625
    %v27 = vmul.f32 %v25, %v25
    %v28 = vsub.f32 %v26, %v27
    %v29 = vmax.f32 %v28, 0.0
    %v30 = vadd.f32 %v29, 1e-05
    %v31 = vrsqrt.pop %v30
    %v32 = vmul.f32 %v31, %v30
    %v33 = vmul.f32 %v32, %v31
    %v34 = vmul.f32 0.5, %v33
    %v35 = vsub.f32 1.5, %v34
    %v36 = vmul.f32 %v31, %v35
    %vm37 = vweird.f32 %v30
    %vm38 = vweird.f32 %v31
    %vm39 = vmor %vm37, %vm38
    %v40 = vsel %vm39, %v31, %v36
    %s41 = smul.u32 0, 8
    %s42 = scalar_lea.vmem %s1, %s41
    %v43 = vld [vmem:[%s42] sm:$0xff]
    %s44 = scalar_lea.vmem %s2, %s41
    %v45 = vld [vmem:[%s44] sm:$0xff]
    %v46 = vmul.f32 %v40, %v43
    %v47 = vmul.f32 %v25, %v46
    %v48 = vsub.f32 %v45, %v47
    %50 = vset.pattern.permute.xlu0 0
    %51 = vperm.xlu0 %50, %v46
    %v52 = vpop.permute.xlu0 %51
    %v54 = vmul.f32 %v15, %v52
    %v55 = vmul.f32 %v16, %v52
    %57 = vset.pattern.permute.xlu0 0
    %58 = vperm.xlu0 %57, %v48
    %v59 = vpop.permute.xlu0 %58
    %v61 = vadd.f32 %v54, %v59
    %v62 = vadd.f32 %v55, %v59
    %63 = vst [vmem:[#allocation2] sm:$0xff] %v61
    %64 = vst [vmem:[#allocation2 + $0x8] sm:$0xff] %v62
    // Predicated region
    $region14: #{tpu_custom_call.1} parent=1 // pred_check
      _
    $region15: #{tpu_custom_call.1} parent=1 // pred_check_branch
      %66 = sbr.rel (0) target = $region17
    $region16: #{tpu_custom_call.1} parent=1 // pred_region
      %68 = vsyncadd [#allocation3], 0
      %s70 = sshll.u32 [#allocation2], 4
      %s71 = int_to_ptr.vmem [resolvable:$true] %s70
      %s72 = sshll.u32 %s3, 4
      %s73 = int_to_ptr.hbm [resolvable:$true] %s72
      %75 = dma.vmem_to_hbm [thread:$0]  %s71, 256, %s73, [#allocation3]
    $region17: #{tpu_custom_call.1} parent=1 // pred_fallthru
      _
    // Predicated region
    $region18: #{tpu_custom_call.1} parent=1 // pred_check
      _
    $region19: #{tpu_custom_call.1} parent=1 // pred_check_branch
      %77 = sbr.rel (0) target = $region21
    $region20: #{tpu_custom_call.1} parent=1 // pred_region
      %79 = dma.done [#allocation3], 256
    $region21: #{tpu_custom_call.1} parent=1 // pred_fallthru
      _
    %80 = vsyncpa [#allocation3], 1

</llo_original>
